<compile_context>
chip_gen: v5e
topology: v5e:2x2
jax: 0.10.0
libtpu: 0.0.40
codegen_flags: <defaults>
</compile_context>

<pallas_src>
import functools

import jax
import jax.numpy as jnp
from jax.experimental import pallas as pl
from jax.experimental.pallas import tpu as pltpu

_LANE = 128        # lane tile (last dim)
_SUBLANE = 8       # f32 sublane tile (second-to-last dim)
_VMEM_TILE_BUDGET = 16 * 1024 * 1024   # per-call tile budget (fits v5e default)
_VMEM_LIMIT = 32 * 1024 * 1024         # explicit scoped-VMEM limit (headroom)


def _round_up(x, m):
    return ((x + m - 1) // m) * m


# ----------------------------- Pallas kernel ------------------------------ #
def _hypernet_fused_kernel(ctx_ref, w_ref, b_ref, out_ref):
    """One fused Linear over the concatenated [weight | bias] output slab.

    ctx_ref : [B_pad, HN_in]   context embedding (bf16 or f32)
    w_ref   : [HN_in, tn]      tile of the concatenated + 128-padded weights
    b_ref   : [1, tn]          tile of the concatenated + 128-padded biases (f32)
    out_ref : [B_pad, tn]      lane-dense output tile
    """
    acc = jnp.dot(ctx_ref[...], w_ref[...], preferred_element_type=jnp.float32)
    out_ref[...] = (acc + b_ref[...]).astype(out_ref.dtype)


# ------------------------------ param packing ------------------------------ #
def pack_hypernet_params(ww, wb, bw, bb, compute_dtype=jnp.bfloat16):
    """Fuse the two Linears' params into one lane-dense slab.

    Each section is padded to a multiple of 128 lanes BEFORE concatenation so
    both the weight and the bias slices of the kernel output start on a lane
    tile boundary.

    ww : [HN_in, D_in*D_out]   HN_weight.weight (pre-transposed to [in, out])
    wb : [1, D_in*D_out]       HN_weight.bias
    bw : [HN_in, D_out]        HN_bias.weight (pre-transposed)
    bb : [1, D_out]            HN_bias.bias

    Returns (w_cat[HN_in, N_pad], b_cat[1, N_pad], (w_out, w_pad, b_out)) with
    N_pad = round_up(D_in*D_out, 128) + round_up(D_out, 128).  Do once/layer.
    """
    w_out = ww.shape[1]
    b_out = bw.shape[1]
    w_pad = _round_up(w_out, _LANE)
    bias_pad = _round_up(b_out, _LANE)

    def _pad_cols(x, n):
        return x if x.shape[1] == n else jnp.pad(x, ((0, 0), (0, n - x.shape[1])))

    w_cat = jnp.concatenate([_pad_cols(ww, w_pad), _pad_cols(bw, bias_pad)], axis=1)
    b_cat = jnp.concatenate([_pad_cols(wb, w_pad), _pad_cols(bb, bias_pad)], axis=1)
    return (w_cat.astype(compute_dtype),
            b_cat.astype(jnp.float32),
            (w_out, w_pad, b_out))


# ------------------------------ tile selection ------------------------------ #
def _choose_tn(n_pad, hn_in, b_pad, w_itemsize, tn_max):
    """Pick the lane tile: as large as the VMEM budget allows (weight-DMA
    bound kernel), but split into >=2 tiles when n_pad is big enough that
    both v7x TensorCores should participate."""
    # Double-buffered bytes per lane of tile width:
    #   2 * weight tile + 2 * output tile (f32) + 2 * bias row (f32)
    per_lane = 2 * hn_in * w_itemsize + 2 * b_pad * 4 + 2 * 4
    tn_budget = max(_LANE, (_VMEM_TILE_BUDGET // per_lane) // _LANE * _LANE)
    tn = min(n_pad, tn_max, tn_budget)
    # Ensure >=2 grid tiles on large problems so the "parallel" axis can
    # shard across v7x's two TensorCores (and their DMA issue bandwidth).
    if n_pad >= 4096 and tn >= n_pad:
        tn = _round_up(pl.cdiv(n_pad, 2), _LANE)
    return tn


# --------------------------------- wrapper --------------------------------- #
@functools.partial(
    jax.jit,
    static_argnames=("w_out", "w_pad", "b_out", "tn_max", "out_dtype",
                     "return_padded"))
def hypernet_forward(context_embedding, w_cat, b_cat, *, w_out, w_pad, b_out,
                     tn_max=32768, out_dtype=jnp.float32, return_padded=False):
    """Pallas wrapper: (weight, bias) = HypernetLayer(context_embedding)."""
    B, hn_in = context_embedding.shape
    n_pad = w_cat.shape[1]

    # Pad batch to a full f32 sublane tile (multiple of 8).
    b_pad = _round_up(max(B, 1), _SUBLANE)
    ctx = context_embedding
    if b_pad != B:
        ctx = jnp.pad(ctx, ((0, b_pad - B), (0, 0)))
    # Matmul operands in the packed compute dtype (bf16 default); f32 accum.
    ctx = ctx.astype(w_cat.dtype)

    w_itemsize = jnp.dtype(w_cat.dtype).itemsize
    tn = _choose_tn(n_pad, hn_in, b_pad, w_itemsize, tn_max)
    grid = (pl.cdiv(n_pad, tn),)

    out_itemsize = jnp.dtype(out_dtype).itemsize
    cost = pl.CostEstimate(
        flops=2 * b_pad * hn_in * n_pad,
        transcendentals=0,
        bytes_accessed=(b_pad * hn_in * w_itemsize        # ctx
                        + hn_in * n_pad * w_itemsize      # w_cat (dominant)
                        + n_pad * 4                       # b_cat
                        + b_pad * n_pad * out_itemsize),  # out
    )

    out = pl.pallas_call(
        _hypernet_fused_kernel,
        out_shape=jax.ShapeDtypeStruct((b_pad, n_pad), out_dtype),
        grid_spec=pltpu.PrefetchScalarGridSpec(
            num_scalar_prefetch=0,
            grid=grid,
            in_specs=[
                pl.BlockSpec((b_pad, hn_in), lambda j: (0, 0)),
                pl.BlockSpec((hn_in, tn), lambda j: (0, j)),
                pl.BlockSpec((1, tn), lambda j: (0, j)),
            ],
            out_specs=pl.BlockSpec((b_pad, tn), lambda j: (0, j)),
        ),
        compiler_params=pltpu.CompilerParams(
            dimension_semantics=("parallel",),
            vmem_limit_bytes=_VMEM_LIMIT,
        ),
        cost_estimate=cost,
    )(ctx, w_cat, b_cat)

    if return_padded:
        # Downstream consumers index the lane-aligned sections themselves:
        #   weight = out[:B, :w_out]; bias = out[:B, w_pad:w_pad + b_out]
        return out

    weight = out[:B, :w_out]
    bias = out[:B, w_pad:w_pad + b_out]
    return weight, bias


# --------------------------- parameter creation ---------------------------- #
def init_hypernet_params(key, hn_input_dim, base_input_dim, base_output_dim,
                         init_dim=None, strategy="default"):
    """Deterministic re-implementation of HypernetLayer.init_hypernet().

    Returns weights pre-transposed to [in, out] layout (PyTorch Linear stores
    [out, in]), plus [1, out]-shaped biases.
    """
    w_out = base_input_dim * base_output_dim
    b_out = base_output_dim
    k0, k1, k2 = jax.random.split(key, 3)

    if strategy == "bias_init":
        initrange = jnp.sqrt(1.0 / init_dim)
        ww = jnp.zeros((hn_input_dim, w_out), jnp.float32)
        wb = initrange * jax.random.normal(k0, (1, w_out), jnp.float32)
    elif strategy == "bias_init_v2":
        initrange = jnp.sqrt(1.0 / init_dim)
        ww = jnp.zeros((hn_input_dim, w_out), jnp.float32)
        wb = jax.random.uniform(k0, (1, w_out), jnp.float32,
                                -initrange, initrange)
    else:  # default strategy in the reference code
        initrange = 0.001
        ww = jax.random.uniform(k1, (hn_input_dim, w_out), jnp.float32,
                                -initrange, initrange)
        wb = jnp.zeros((1, w_out), jnp.float32)

    if strategy == "bias_init_v2":
        initrange = jnp.sqrt(1.0 / init_dim)
        bw = jnp.zeros((hn_input_dim, b_out), jnp.float32)
        bb = jax.random.uniform(k2, (1, b_out), jnp.float32,
                                -initrange, initrange)
    else:
        bw = jnp.zeros((hn_input_dim, b_out), jnp.float32)
        bb = jnp.zeros((1, b_out), jnp.float32)
    return ww, wb, bw, bb


# ---------------------------------- main ----------------------------------- #
if __name__ == "__main__":
    # Small, forward-consistent shapes:
    #   CONTEXT_EMBED_SIZE (HN input dim) = 32
    #   base_input_dim = 12, base_output_dim = 16 -> weight out dim = 192
    #   (deliberately NOT a multiple of 128 to exercise the aligned packing)
    #   batch of context embeddings B = 8
    B = 8
    HN_INPUT_DIM = 32          # cfg.MODEL.HYPERNET.CONTEXT_EMBED_SIZE
    BASE_INPUT_DIM = 12
    BASE_OUTPUT_DIM = 16
    INIT_DIM = BASE_INPUT_DIM

    key = jax.random.PRNGKey(0)
    k_ctx, k_params, k_extra = jax.random.split(key, 3)

    context_embedding = jax.random.normal(
        k_ctx, (B, HN_INPUT_DIM), dtype=jnp.float32)

    # Default init strategy (uniform(-1e-3, 1e-3) weight, zero biases); the
    # other strategies zero the weight matrix entirely, which would not
    # exercise the matmul path.
    ww, wb, bw, bb = init_hypernet_params(
        k_params, HN_INPUT_DIM, BASE_INPUT_DIM, BASE_OUTPUT_DIM,
        init_dim=INIT_DIM, strategy="default")
    # Give HN_bias a nonzero weight so both sections of the fused matmul are
    # meaningfully checked (same shapes as the module; synthetic values).
    bw = 0.01 * jax.random.normal(k_extra, bw.shape, dtype=jnp.float32)

    # Pure-JAX reference of the forward semantics.
    ref_weight = context_embedding @ ww + wb
    ref_bias = context_embedding @ bw + bb

    # ---- f32 operands: bit-accurate check against the reference ----
    w_cat32, b_cat32, (W_OUT, W_PAD, B_OUT) = pack_hypernet_params(
        ww, wb, bw, bb, compute_dtype=jnp.float32)
    weight, bias = hypernet_forward(
        context_embedding, w_cat32, b_cat32,
        w_out=W_OUT, w_pad=W_PAD, b_out=B_OUT)
    jax.block_until_ready((weight, bias))

    assert weight.shape == (B, BASE_INPUT_DIM * BASE_OUTPUT_DIM)
    assert bias.shape == (B, BASE_OUTPUT_DIM)
    assert jnp.allclose(weight, ref_weight, atol=1e-5, rtol=1e-5)
    assert jnp.allclose(bias, ref_bias, atol=1e-5, rtol=1e-5)

    # ---- default bf16 operands (half the weight DMA), f32 accumulation ----
    w_cat16, b_cat16, _ = pack_hypernet_params(ww, wb, bw, bb)  # bf16 default
    weight16, bias16 = hypernet_forward(
        context_embedding, w_cat16, b_cat16,
        w_out=W_OUT, w_pad=W_PAD, b_out=B_OUT)
    jax.block_until_ready((weight16, bias16))

    assert jnp.allclose(weight16, ref_weight, atol=5e-3, rtol=1e-1)
    assert jnp.allclose(bias16, ref_bias, atol=5e-3, rtol=1e-1)

    # ---- padded-slab path (no post-kernel slicing for downstream users) ----
    slab = hypernet_forward(
        context_embedding, w_cat16, b_cat16,
        w_out=W_OUT, w_pad=W_PAD, b_out=B_OUT, return_padded=True)
    jax.block_until_ready(slab)
    assert jnp.allclose(slab[:B, :W_OUT], ref_weight, atol=5e-3, rtol=1e-1)
    assert jnp.allclose(slab[:B, W_PAD:W_PAD + B_OUT], ref_bias,
                        atol=5e-3, rtol=1e-1)

    print("KERNEL_OK")
</pallas_src>

<mosaic_0001>
module attributes {stable_mosaic.version = 11 : i64} {
  func.func @_hypernet_fused_kernel(%arg0: i32, %arg1: memref<8x32xf32, #tpu.memory_space<vmem>>, %arg2: memref<32x384xf32, #tpu.memory_space<vmem>>, %arg3: memref<1x384xf32, #tpu.memory_space<vmem>>, %arg4: memref<8x384xf32, #tpu.memory_space<vmem>>) attributes {dimension_semantics = [#tpu.dimension_semantics<parallel>], iteration_bounds = array<i64: 1>, scalar_prefetch = 0 : i64, scratch_operands = 0 : i64, tpu.core_type = #tpu.core_type<tc>, window_params = [{pipeline_mode = #tpu.pipeline_mode<synchronous>, transform_indices = @transform_0, window_bounds = array<i64: 8, 32>}, {transform_indices = @transform_1, window_bounds = array<i64: 32, 384>}, {transform_indices = @transform_2, window_bounds = array<i64: 1, 384>}, {transform_indices = @transform_3, window_bounds = array<i64: 8, 384>}]} {
    %c0 = arith.constant 0 : index
    %c0_0 = arith.constant 0 : index
    %0 = vector.load %arg1[%c0, %c0_0] : memref<8x32xf32, #tpu.memory_space<vmem>>, vector<8x32xf32>
    %c0_1 = arith.constant 0 : index
    %c0_2 = arith.constant 0 : index
    %1 = vector.load %arg2[%c0_1, %c0_2] : memref<32x384xf32, #tpu.memory_space<vmem>>, vector<32x384xf32>
    %cst = arith.constant dense<0.000000e+00> : vector<8x384xf32>
    %2 = tpu.matmul %0, %1, %cst {dimension_numbers = #tpu.dot_dimension_numbers<[1], [0], [0], [1], [0, 0, 1, 1], [], []>} : vector<8x32xf32>, vector<32x384xf32>, vector<8x384xf32> -> vector<8x384xf32>
    %c0_3 = arith.constant 0 : index
    %c0_4 = arith.constant 0 : index
    %3 = vector.load %arg3[%c0_3, %c0_4] : memref<1x384xf32, #tpu.memory_space<vmem>>, vector<1x384xf32>
    %4 = vector.broadcast %3 : vector<1x384xf32> to vector<8x384xf32>
    %5 = arith.addf %2, %4 : vector<8x384xf32>
    %c0_5 = arith.constant 0 : index
    %c0_6 = arith.constant 0 : index
    %6 = vector.load %arg4[%c0_5, %c0_6] : memref<8x384xf32, #tpu.memory_space<vmem>>, vector<8x384xf32>
    tpu.vector_store %arg4[%c0_5, %c0_6], %5 {strides = array<i32>} : memref<8x384xf32, #tpu.memory_space<vmem>>, vector<8x384xf32>,
    return
  }
  func.func @transform_0(%arg0: i32) -> (i32, i32) {
    %c0_i32 = arith.constant 0 : i32
    %c0_i32_0 = arith.constant 0 : i32
    %c0_i32_1 = arith.constant 0 : i32
    return %c0_i32, %c0_i32_0 : i32, i32
  }
  func.func @transform_1(%arg0: i32) -> (i32, i32) {
    %c0_i32 = arith.constant 0 : i32
    %c0_i32_0 = arith.constant 0 : i32
    return %c0_i32, %arg0 : i32, i32
  }
  func.func @transform_2(%arg0: i32) -> (i32, i32) {
    %c0_i32 = arith.constant 0 : i32
    %c0_i32_0 = arith.constant 0 : i32
    return %c0_i32, %arg0 : i32, i32
  }
  func.func @transform_3(%arg0: i32) -> (i32, i32) {
    %c0_i32 = arith.constant 0 : i32
    %c0_i32_0 = arith.constant 0 : i32
    return %c0_i32, %arg0 : i32, i32
  }
}

</mosaic_0001>

<llo_original>
// kernel: hypernet_forward.1
$region0: #{hypernet_forward.1}
  #allocation0 [shape = 'u32[]', space=smem, size = 0x4, offset = 0x4, fixed_abs, tag = 'smem constant byte address 0x4 - core index']
  #allocation1 [shape = 'u32[72,128]{1,0:T(1,128)}', space=vmem, size = 0x9000, scoped, tag = 'internal scratch']
  %s0 = inlined_call_operand.hbm [shape: f32[8,32], index: 0, kind: input, shape index: {}]
  %s1 = inlined_call_operand.hbm [shape: f32[32,384], index: 1, kind: input, shape index: {}]
  %s2 = inlined_call_operand.hbm [shape: f32[1,384], index: 2, kind: input, shape index: {}]
  %s3 = inlined_call_operand.vmem [shape: f32[8,384], index: 3, kind: output, shape index: {}]
  %s4 = sld [smem:[#allocation0]]
  $region34: #{hypernet_forward.1} parent=0
    _
  %s6 = ssub.s32 1, %s4
  %s7 = scalar_select 0, %s6, %s4
  $region1: #{hypernet_forward.1} parent=0
    #allocation2 [shape = 'u8[4096]{0}', space=vmem, size = 0x1000, scoped, tag = 'input window, operand 0, single buffered']
    #allocation3 [shape = 's32[1]{0}', space=sflag, size = 0x4, scoped, tag = 'scoped memory for hypernet_forward.1']
    #allocation4 [shape = 'u8[49152]{0}', space=vmem, size = 0xc000, scoped, tag = 'input window, operand 1, single buffered']
    #allocation5 [shape = 's32[1]{0}', space=sflag, size = 0x4, scoped, tag = 'scoped memory for hypernet_forward.1']
    #allocation6 [shape = 'u8[1536]{0}', space=vmem, size = 0x800, scoped, tag = 'input window, operand 2, single buffered']
    %8 = vsyncpa [#allocation3], 0
    %9 = vsyncpa [#allocation5], 0
    // Predicated region
    $region2: #{hypernet_forward.1} parent=1 // pred_check
      _
    $region3: #{hypernet_forward.1} parent=1 // pred_check_branch
      %11 = sbr.rel (0) target = $region5
    $region4: #{hypernet_forward.1} parent=1 // pred_region
      %13 = vsyncadd [#allocation3], 0
      %s15 = sshll.u32 %s0, 4
      %s16 = int_to_ptr.hbm [resolvable:$true] %s15
      %s17 = sshll.u32 [#allocation2], 4
      %s18 = int_to_ptr.vmem [resolvable:$true] %s17
      %20 = dma.hbm_to_vmem [thread:$0]  %s16, 128, %s18, [#allocation3]
    $region5: #{hypernet_forward.1} parent=1 // pred_fallthru
      _
    // Predicated region
    $region6: #{hypernet_forward.1} parent=1 // pred_check
      _
    $region7: #{hypernet_forward.1} parent=1 // pred_check_branch
      %22 = sbr.rel (0) target = $region9
    $region8: #{hypernet_forward.1} parent=1 // pred_region
      %24 = vsyncadd [#allocation5], 0
      %s25 = sshll.u32 %s1, 4
      %s26 = int_to_ptr.hbm [resolvable:$true] %s25
      %s27 = sshll.u32 [#allocation4], 4
      %s28 = int_to_ptr.vmem [resolvable:$true] %s27
      %33 = dma.hbm_to_vmem [thread:$0]  %s26, 1536, %s28, [#allocation5], 384, 384, 24
    $region9: #{hypernet_forward.1} parent=1 // pred_fallthru
      _
    // Predicated region
    $region10: #{hypernet_forward.1} parent=1 // pred_check
      _
    $region11: #{hypernet_forward.1} parent=1 // pred_check_branch
      %35 = sbr.rel (0) target = $region13
    $region12: #{hypernet_forward.1} parent=1 // pred_region
      %37 = vsyncadd [#allocation5], 0
      %s39 = sshll.u32 %s2, 4
      %s40 = int_to_ptr.hbm [resolvable:$true] %s39
      %s41 = sshll.u32 [#allocation6], 4
      %s42 = int_to_ptr.vmem [resolvable:$true] %s41
      %44 = dma.hbm_to_vmem [thread:$0]  %s40, 48, %s42, [#allocation5]
    $region13: #{hypernet_forward.1} parent=1 // pred_fallthru
      _
    // Predicated region
    $region14: #{hypernet_forward.1} parent=1 // pred_check
      _
    $region15: #{hypernet_forward.1} parent=1 // pred_check_branch
      %46 = sbr.rel (0) target = $region17
    $region16: #{hypernet_forward.1} parent=1 // pred_region
      %48 = dma.done [#allocation3], 128
    $region17: #{hypernet_forward.1} parent=1 // pred_fallthru
      _
    // Predicated region
    $region18: #{hypernet_forward.1} parent=1 // pred_check
      _
    $region19: #{hypernet_forward.1} parent=1 // pred_check_branch
      %50 = sbr.rel (0) target = $region21
    $region20: #{hypernet_forward.1} parent=1 // pred_region
      %52 = dma.done [#allocation5], 1536
    $region21: #{hypernet_forward.1} parent=1 // pred_fallthru
      _
    // Predicated region
    $region22: #{hypernet_forward.1} parent=1 // pred_check
      _
    $region23: #{hypernet_forward.1} parent=1 // pred_check_branch
      %54 = sbr.rel (0) target = $region25
    $region24: #{hypernet_forward.1} parent=1 // pred_region
      %56 = dma.done [#allocation5], 48
    $region25: #{hypernet_forward.1} parent=1 // pred_fallthru
      _
    %v57 = vld [vmem:[#allocation2] sm:$0xff]
    %v58 = vld [vmem:[#allocation4] sm:$0xff]
    %v59 = vld [vmem:[#allocation4 + $0x8] sm:$0xff]
    %v60 = vld [vmem:[#allocation4 + $0x10] sm:$0xff]
    %v61 = vld [vmem:[#allocation4 + $0x18] sm:$0xff]
    %v62 = vld [vmem:[#allocation4 + $0x20] sm:$0xff]
    %v63 = vld [vmem:[#allocation4 + $0x28] sm:$0xff]
    %v64 = vld [vmem:[#allocation4 + $0x30] sm:$0xff]
    %v65 = vld [vmem:[#allocation4 + $0x38] sm:$0xff]
    %v66 = vld [vmem:[#allocation4 + $0x40] sm:$0xff]
    %v67 = vld [vmem:[#allocation4 + $0x48] sm:$0xff]
    %v68 = vld [vmem:[#allocation4 + $0x50] sm:$0xff]
    %v69 = vld [vmem:[#allocation4 + $0x58] sm:$0xff]
    %v70 = vld [vmem:[#allocation6] sm:$0x7]
    %v72 = vperm.slane %v70, 0
    %v73 = vperm.slane %v70, 1
    %v74 = vperm.slane %v70, 2
    %vm78 = vcmask 261120
    %v80 = vsel %vm78, %v57, 0
    %82 = vmatpush.msra.mxu0 0.0
    %83 = vmatpush.msra.mxu0 0.0
    %84 = vmatpush.msra.mxu0 0.0
    %85 = vmatpush.msra.mxu0 0.0
    %86 = vmatpush.msra.mxu0 0.0
    %87 = vmatpush.msra.mxu0 0.0
    %88 = vmatpush.msra.mxu0 0.0
    %89 = vmatpush.msra.mxu0 0.0
    %90 = vmatpush.msra.mxu0 0.0
    %91 = vmatpush.msra.mxu0 0.0
    %92 = vmatpush.msra.mxu0 0.0
    %93 = vmatpush.msra.mxu0 0.0
    %94 = vmatpush.msra.mxu0 %v67
    %95 = vmatpush.msra.mxu0 %v64
    %96 = vmatpush.msra.mxu0 %v61
    %97 = vmatpush.msra.mxu0 %v58
    %98 = vmatmul.f32.gmra.mxu0 %v80
    %v99 = vpop.f32.mrf.mxu0
    %v100 = vadd.f32 %v72, %v99
    %101 = vdwg.mxu0
    %102 = vmatpush.msra.mxu0 0.0
    %103 = vmatpush.msra.mxu0 0.0
    %104 = vmatpush.msra.mxu0 0.0
    %105 = vmatpush.msra.mxu0 0.0
    %106 = vmatpush.msra.mxu0 0.0
    %107 = vmatpush.msra.mxu0 0.0
    %108 = vmatpush.msra.mxu0 0.0
    %109 = vmatpush.msra.mxu0 0.0
    %110 = vmatpush.msra.mxu0 0.0
    %111 = vmatpush.msra.mxu0 0.0
    %112 = vmatpush.msra.mxu0 0.0
    %113 = vmatpush.msra.mxu0 0.0
    %114 = vmatpush.msra.mxu0 %v68
    %115 = vmatpush.msra.mxu0 %v65
    %116 = vmatpush.msra.mxu0 %v62
    %117 = vmatpush.msra.mxu0 %v59
    %118 = vmatmul.f32.gmra.mxu0 %v80
    %v119 = vpop.f32.mrf.mxu0
    %v120 = vadd.f32 %v73, %v119
    %121 = vdwg.mxu0
    %122 = vmatpush.msra.mxu0 0.0
    %123 = vmatpush.msra.mxu0 0.0
    %124 = vmatpush.msra.mxu0 0.0
    %125 = vmatpush.msra.mxu0 0.0
    %126 = vmatpush.msra.mxu0 0.0
    %127 = vmatpush.msra.mxu0 0.0
    %128 = vmatpush.msra.mxu0 0.0
    %129 = vmatpush.msra.mxu0 0.0
    %130 = vmatpush.msra.mxu0 0.0
    %131 = vmatpush.msra.mxu0 0.0
    %132 = vmatpush.msra.mxu0 0.0
    %133 = vmatpush.msra.mxu0 0.0
    %134 = vmatpush.msra.mxu0 %v69
    %135 = vmatpush.msra.mxu0 %v66
    %136 = vmatpush.msra.mxu0 %v63
    %137 = vmatpush.msra.mxu0 %v60
    %138 = vmatmul.f32.gmra.mxu0 %v80
    %v139 = vpop.f32.mrf.mxu0
    %v140 = vadd.f32 %v74, %v139
    %141 = vdwg.mxu0
    %142 = vst [vmem:[%s3] sm:$0xff] %v100
    %143 = vst [vmem:[%s3 + $0x8] sm:$0xff] %v120
    %144 = vst [vmem:[%s3 + $0x10] sm:$0xff] %v140
    // Predicated region
    $region26: #{hypernet_forward.1} parent=1 // pred_check
      _
    $region27: #{hypernet_forward.1} parent=1 // pred_check_branch
      %146 = sbr.rel (0) target = $region29
    $region28: #{hypernet_forward.1} parent=1 // pred_region
      _
    $region29: #{hypernet_forward.1} parent=1 // pred_fallthru
      _
    // Predicated region
    $region30: #{hypernet_forward.1} parent=1 // pred_check
      _
    $region31: #{hypernet_forward.1} parent=1 // pred_check_branch
      %148 = sbr.rel (0) target = $region33
    $region32: #{hypernet_forward.1} parent=1 // pred_region
      _
    $region33: #{hypernet_forward.1} parent=1 // pred_fallthru
      _
    %149 = vsyncpa [#allocation3], 1
    %150 = vsyncpa [#allocation5], 1

</llo_original>
